<compile_context>
chip_gen: v5e
topology: v5e:2x2
jax: 0.10.0
libtpu: 0.0.40
codegen_flags: <defaults>
</compile_context>

<pallas_src>
import functools

import jax
import jax.numpy as jnp
import numpy as np
from jax.experimental import pallas as pl
from jax.experimental.pallas import tpu as pltpu

TEMPERATURE = 0.5
BASE_TEMPERATURE = 0.5  # unused in forward (matches the PyTorch module)
EPS = 1e-6


def _vmem_limit_bytes():
    """Generation-aware VMEM limit: ~half of physical VMEM, capped at 96 MiB."""
    cap = 128 * 1024 * 1024
    try:
        cap = int(getattr(pltpu.get_tpu_info(), "vmem_capacity_bytes", cap))
    except Exception:  # conservative fallback if the query is unavailable
        pass
    return int(min(96 * 1024 * 1024, max(32 * 1024 * 1024, cap // 2)))


def _pick_tile(n, cap, mult):
    """Largest t <= cap with n % t == 0 and t % mult == 0; falls back to the
    full extent n (always a legal block dim) when no such divisor exists."""
    if n <= cap:
        return n
    t = (cap // mult) * mult
    while t >= mult:
        if n % t == 0:
            return t
        t -= mult
    return n


# ---------------------------------------------------------------------------
# Kernel 1: adc_i = cos(a_i, a_i) / T for both feature halves (no anchor
# concat).  cos(a, a) = dot / max(||a||*||a||, eps) = ssq / max(ssq, eps).
# ---------------------------------------------------------------------------
def _adc_kernel(pro_ref, lg_ref, adc_pro_ref, adc_lg_ref, *, inv_temp, eps):
    for src, dst in ((pro_ref, adc_pro_ref), (lg_ref, adc_lg_ref)):
        a = src[...].astype(jnp.float32)                 # (TR1, D)
        ssq = jnp.sum(a * a, axis=-1, keepdims=True)     # (TR1, 1)
        dst[...] = (ssq / jnp.maximum(ssq, eps)) * inv_temp


# ---------------------------------------------------------------------------
# Kernel 2: per-row supervised-contrastive loss.
#   grid = (row tiles i [parallel], label chunks j [arbitrary, reduction]).
#   s_ref       (1,1)  f32  SMEM : S = sum_j exp(l_j)           (grid-invariant)
#   lab_col_ref (NC,1) i32  VMEM : labels of chunk j (column view)
#   rhs_ref     (2,NC) bf16 VMEM : [l_j ; 1] chunk (MXU operand)
#   lab_row_ref (1,TR) i32  VMEM : labels of row tile i
#   l_row_ref   (1,TR) f32  VMEM : logits of row tile i
#   out_ref     (1,TR) f32       : per-row loss (written at last chunk)
#   acc_ref     (2,TR) f32  VMEM : [sum_j mask*l_j ; sum_j mask] accumulator
# ---------------------------------------------------------------------------
def _loss_kernel(s_ref, lab_col_ref, rhs_ref, lab_row_ref, l_row_ref,
                 out_ref, acc_ref):
    j = pl.program_id(1)

    @pl.when(j == 0)
    def _init():
        acc_ref[...] = jnp.zeros_like(acc_ref)

    # Same-label mask chunk, transposed so the row axis lands in lanes.  Built
    # as an int compare (VPU) and converted to bf16 once, right before the MXU
    # dot (mask values are exactly 0/1; accumulation stays f32).
    eq_t = (lab_col_ref[...] == lab_row_ref[...]).astype(jnp.bfloat16)  # (NC, TR)
    acc_ref[...] += jnp.dot(rhs_ref[...], eq_t,
                            preferred_element_type=jnp.float32)         # (2, TR)

    @pl.when(j == pl.num_programs(1) - 1)
    def _finalize():
        l_i = l_row_ref[...]                        # (1, TR) own logits
        num = acc_ref[0:1, :] - l_i                 # sum_{j!=i} mask * l_j
        cnt = acc_ref[1:2, :] - 1.0                 # sum_{j!=i} mask
        # logits_mask only zeroes the diagonal, so the masked softmax
        # denominator is S - exp(l_i).  (Subject to cancellation only if one
        # row dominates S; benign for this module's self-cosine logits.)
        denom = s_ref[0, 0] - jnp.exp(l_i)
        out_ref[...] = jnp.log(denom) - num / cnt   # = -(num/cnt - log(denom))


@functools.partial(jax.jit,
                   static_argnames=("temperature", "eps", "row_tile", "chunk"))
def ce_contrastive_loss(fea_pro, fea_lg, labels, temperature=TEMPERATURE,
                        eps=EPS, row_tile=None, chunk=None):
    """fea_pro: [bsz, d], fea_lg: [bsz, d], labels: [bsz] -> scalar loss."""
    bsz, d = fea_pro.shape
    n = 2 * bsz
    vmem_limit = _vmem_limit_bytes()

    # ---- kernel 1: adc_i = cos(a_i, a_i) / T, reading each half directly ----
    row_cap1 = max(8, vmem_limit // (4 * d * 8))   # 2 inputs x 2 bufs x f32 + headroom
    tr1 = _pick_tile(bsz, row_cap1, 8)
    adc_pro, adc_lg = pl.pallas_call(
        functools.partial(_adc_kernel, inv_temp=1.0 / temperature, eps=eps),
        out_shape=(jax.ShapeDtypeStruct((bsz, 1), jnp.float32),
                   jax.ShapeDtypeStruct((bsz, 1), jnp.float32)),
        grid=(bsz // tr1,),
        in_specs=[pl.BlockSpec((tr1, d), lambda i: (i, 0)),
                  pl.BlockSpec((tr1, d), lambda i: (i, 0))],
        out_specs=(pl.BlockSpec((tr1, 1), lambda i: (i, 0)),
                   pl.BlockSpec((tr1, 1), lambda i: (i, 0))),
        compiler_params=pltpu.CompilerParams(
            dimension_semantics=("parallel",),
            vmem_limit_bytes=vmem_limit),
    )(fea_pro, fea_lg)

    # ---- glue over O(N) floats: grid-invariant stats & MXU operands ----
    adc = jnp.concatenate([adc_pro, adc_lg], axis=0).reshape(n)        # (N,)
    l_vec = adc - jnp.max(adc)                                         # logits
    s_total = jnp.sum(jnp.exp(l_vec)).reshape(1, 1)                    # S -> SMEM scalar
    l_row = l_vec.reshape(1, n)                                        # (1, N) f32
    rhs = jnp.stack([l_vec, jnp.ones_like(l_vec)]).astype(jnp.bfloat16)  # (2, N)
    lab2 = jnp.concatenate([labels, labels]).astype(jnp.int32)
    lab_row = lab2.reshape(1, n)                                       # (1, N)
    lab_col = lab2.reshape(n, 1)                                       # (N, 1)

    # ---- kernel 2 tiles: lane blocks multiples of 128 (or full extent);
    # keep >= 2 row steps at large N so "parallel" can shard across 2 TCs ----
    if row_tile is None:
        row_cap2 = n // 2 if n >= 256 else n
        row_tile = _pick_tile(n, min(2048, row_cap2), 128)
    if chunk is None:
        chunk_cap = max(128, vmem_limit // (16 * row_tile))  # bounds (NC, TR) eq slab
        chunk = _pick_tile(n, min(8192, chunk_cap), 128)

    per_row = pl.pallas_call(
        _loss_kernel,
        out_shape=jax.ShapeDtypeStruct((1, n), jnp.float32),
        grid=(n // row_tile, n // chunk),
        in_specs=[
            pl.BlockSpec(memory_space=pltpu.MemorySpace.SMEM),   # S (scalar)
            pl.BlockSpec((chunk, 1), lambda i, j: (j, 0)),       # labels, chunk col
            pl.BlockSpec((2, chunk), lambda i, j: (0, j)),       # [l ; 1], chunk
            pl.BlockSpec((1, row_tile), lambda i, j: (0, i)),    # labels, row tile
            pl.BlockSpec((1, row_tile), lambda i, j: (0, i)),    # logits, row tile
        ],
        out_specs=pl.BlockSpec((1, row_tile), lambda i, j: (0, i)),
        scratch_shapes=[pltpu.VMEM((2, row_tile), jnp.float32)],
        compiler_params=pltpu.CompilerParams(
            dimension_semantics=("parallel", "arbitrary"),
            vmem_limit_bytes=vmem_limit),
    )(s_total, lab_col, rhs, lab_row, l_row)

    # Final mean over the N per-row losses (O(N) floats, glue-side).
    return jnp.mean(per_row)


def _reference_loss(fea_pro, fea_lg, labels, temperature=TEMPERATURE, eps=EPS):
    """Pure-JAX mirror of the PyTorch forward (for correctness checking)."""
    anchor = jnp.concatenate([fea_pro, fea_lg], axis=0).astype(jnp.float32)
    n = anchor.shape[0]
    dot = jnp.sum(anchor * anchor, axis=-1)
    adc = dot / jnp.maximum(dot, eps) / temperature     # CosineSimilarity(a, a) / T
    logits = adc - jnp.max(adc)
    lab2 = jnp.concatenate([labels, labels])
    eq = (lab2[:, None] == lab2[None, :]).astype(jnp.float32)
    logits_mask = 1.0 - jnp.eye(n, dtype=jnp.float32)
    mask = logits_mask * eq
    exp_logits = jnp.exp(logits)[None, :] * logits_mask
    log_prob = logits[None, :] - jnp.log(jnp.sum(exp_logits, axis=1, keepdims=True))
    mlpp = jnp.sum(mask * log_prob, axis=1) / jnp.sum(mask, axis=1)
    return jnp.mean(-mlpp)


if __name__ == "__main__":
    # Test 1: small shapes, single row tile / single chunk.  Two rows are
    # zeroed so the cosine eps-clamp fires and the logits become non-constant,
    # which actually exercises the masked sums and the softmax denominator.
    bsz, d_model = 8, 128
    k1, k2 = jax.random.split(jax.random.PRNGKey(0))
    fea_pro = jax.random.normal(k1, (bsz, d_model), dtype=jnp.float32).at[3].set(0.0)
    fea_lg = jax.random.normal(k2, (bsz, d_model), dtype=jnp.float32).at[5].set(0.0)
    labels = jnp.array([0, 1, 0, 2, 1, 0, 2, 1], dtype=jnp.int32)

    loss = jax.block_until_ready(ce_contrastive_loss(fea_pro, fea_lg, labels))
    ref = jax.block_until_ready(_reference_loss(fea_pro, fea_lg, labels))
    assert np.allclose(np.asarray(loss), np.asarray(ref), rtol=1e-4, atol=1e-5), (
        f"test1: kernel {loss} vs reference {ref}")

    # Test 2: larger N with a forced multi-tile / multi-chunk (3 x 3) grid to
    # exercise the accumulator pipeline across label chunks and row tiles.
    bsz2, d2 = 192, 64
    k3, k4, k5 = jax.random.split(jax.random.PRNGKey(1), 3)
    fea_pro2 = jax.random.normal(k3, (bsz2, d2), dtype=jnp.float32).at[10].set(0.0)
    fea_lg2 = jax.random.normal(k4, (bsz2, d2), dtype=jnp.float32).at[100].set(0.0)
    labels2 = jax.random.randint(k5, (bsz2,), 0, 5, dtype=jnp.int32)

    loss2 = jax.block_until_ready(
        ce_contrastive_loss(fea_pro2, fea_lg2, labels2, row_tile=128, chunk=128))
    ref2 = jax.block_until_ready(_reference_loss(fea_pro2, fea_lg2, labels2))
    assert np.allclose(np.asarray(loss2), np.asarray(ref2), rtol=1e-4, atol=1e-5), (
        f"test2: kernel {loss2} vs reference {ref2}")

    print("KERNEL_OK")
</pallas_src>

<mosaic_0001>
module attributes {stable_mosaic.version = 11 : i64} {
  func.func @_adc_kernel(%arg0: i32, %arg1: memref<8x128xf32, #tpu.memory_space<vmem>>, %arg2: memref<8x128xf32, #tpu.memory_space<vmem>>, %arg3: memref<8x1xf32, #tpu.memory_space<vmem>>, %arg4: memref<8x1xf32, #tpu.memory_space<vmem>>) attributes {dimension_semantics = [#tpu.dimension_semantics<parallel>], iteration_bounds = array<i64: 1>, scalar_prefetch = 0 : i64, scratch_operands = 0 : i64, tpu.core_type = #tpu.core_type<tc>, window_params = [{transform_indices = @transform_0, window_bounds = array<i64: 8, 128>}, {transform_indices = @transform_1, window_bounds = array<i64: 8, 128>}, {transform_indices = @transform_2, window_bounds = array<i64: 8, 1>}, {transform_indices = @transform_3, window_bounds = array<i64: 8, 1>}]} {
    %c0 = arith.constant 0 : index
    %c0_0 = arith.constant 0 : index
    %0 = vector.load %arg1[%c0, %c0_0] : memref<8x128xf32, #tpu.memory_space<vmem>>, vector<8x128xf32>
    %1 = arith.mulf %0, %0 : vector<8x128xf32>
    %cst = arith.constant dense<0.000000e+00> : vector<8xf32>
    %2 = vector.multi_reduction <add>, %1, %cst [1] : vector<8x128xf32> to vector<8xf32>
    %3 = vector.shape_cast %2 : vector<8xf32> to vector<8x1xf32>
    %cst_1 = arith.constant 9.99999997E-7 : f32
    %4 = vector.broadcast %cst_1 : f32 to vector<8x1xf32>
    %5 = arith.maximumf %3, %4 : vector<8x1xf32>
    %6 = arith.divf %3, %5 : vector<8x1xf32>
    %cst_2 = arith.constant 2.000000e+00 : f32
    %7 = vector.broadcast %cst_2 : f32 to vector<8x1xf32>
    %8 = arith.mulf %6, %7 : vector<8x1xf32>
    %c0_3 = arith.constant 0 : index
    %c0_4 = arith.constant 0 : index
    %9 = vector.load %arg3[%c0_3, %c0_4] : memref<8x1xf32, #tpu.memory_space<vmem>>, vector<8x1xf32>
    tpu.vector_store %arg3[%c0_3, %c0_4], %8 {strides = array<i32>} : memref<8x1xf32, #tpu.memory_space<vmem>>, vector<8x1xf32>,
    %c0_5 = arith.constant 0 : index
    %c0_6 = arith.constant 0 : index
    %10 = vector.load %arg2[%c0_5, %c0_6] : memref<8x128xf32, #tpu.memory_space<vmem>>, vector<8x128xf32>
    %11 = arith.mulf %10, %10 : vector<8x128xf32>
    %cst_7 = arith.constant dense<0.000000e+00> : vector<8xf32>
    %12 = vector.multi_reduction <add>, %11, %cst_7 [1] : vector<8x128xf32> to vector<8xf32>
    %13 = vector.shape_cast %12 : vector<8xf32> to vector<8x1xf32>
    %cst_8 = arith.constant 9.99999997E-7 : f32
    %14 = vector.broadcast %cst_8 : f32 to vector<8x1xf32>
    %15 = arith.maximumf %13, %14 : vector<8x1xf32>
    %16 = arith.divf %13, %15 : vector<8x1xf32>
    %cst_9 = arith.constant 2.000000e+00 : f32
    %17 = vector.broadcast %cst_9 : f32 to vector<8x1xf32>
    %18 = arith.mulf %16, %17 : vector<8x1xf32>
    %c0_10 = arith.constant 0 : index
    %c0_11 = arith.constant 0 : index
    %19 = vector.load %arg4[%c0_10, %c0_11] : memref<8x1xf32, #tpu.memory_space<vmem>>, vector<8x1xf32>
    tpu.vector_store %arg4[%c0_10, %c0_11], %18 {strides = array<i32>} : memref<8x1xf32, #tpu.memory_space<vmem>>, vector<8x1xf32>,
    return
  }
  func.func @transform_0(%arg0: i32) -> (i32, i32) {
    %c0_i32 = arith.constant 0 : i32
    %c0_i32_0 = arith.constant 0 : i32
    return %arg0, %c0_i32 : i32, i32
  }
  func.func @transform_1(%arg0: i32) -> (i32, i32) {
    %c0_i32 = arith.constant 0 : i32
    %c0_i32_0 = arith.constant 0 : i32
    return %arg0, %c0_i32 : i32, i32
  }
  func.func @transform_2(%arg0: i32) -> (i32, i32) {
    %c0_i32 = arith.constant 0 : i32
    %c0_i32_0 = arith.constant 0 : i32
    return %arg0, %c0_i32 : i32, i32
  }
  func.func @transform_3(%arg0: i32) -> (i32, i32) {
    %c0_i32 = arith.constant 0 : i32
    %c0_i32_0 = arith.constant 0 : i32
    return %arg0, %c0_i32 : i32, i32
  }
}

module attributes {stable_mosaic.version = 11 : i64} {
  func.func @_loss_kernel(%arg0: i32, %arg1: i32, %arg2: memref<1x1xf32, #tpu.memory_space<smem>>, %arg3: memref<16x1xi32, #tpu.memory_space<vmem>>, %arg4: memref<2x16xbf16, #tpu.memory_space<vmem>>, %arg5: memref<1x16xi32, #tpu.memory_space<vmem>>, %arg6: memref<1x16xf32, #tpu.memory_space<vmem>>, %arg7: memref<1x16xf32, #tpu.memory_space<vmem>>, %arg8: memref<2x16xf32, #tpu.memory_space<vmem>>) attributes {dimension_semantics = [#tpu.dimension_semantics<parallel>, #tpu.dimension_semantics<arbitrary>], iteration_bounds = array<i64: 1, 1>, scalar_prefetch = 0 : i64, scratch_operands = 1 : i64, tpu.core_type = #tpu.core_type<tc>, window_params = [{transform_indices = @transform_0, window_bounds = array<i64: 1, 1>}, {transform_indices = @transform_1, window_bounds = array<i64: 16, 1>}, {transform_indices = @transform_2, window_bounds = array<i64: 2, 16>}, {transform_indices = @transform_3, window_bounds = array<i64: 1, 16>}, {transform_indices = @transform_4, window_bounds = array<i64: 1, 16>}, {transform_indices = @transform_5, window_bounds = array<i64: 1, 16>}]} {
    %c0_i32 = arith.constant 0 : i32
    %0 = arith.cmpi eq, %arg1, %c0_i32 : i32
    %1 = arith.extui %0 : i1 to i32
    %c0_i32_0 = arith.constant 0 : i32
    %2 = arith.cmpi ne, %1, %c0_i32_0 : i32
    scf.if %2 {
      %cst_12 = arith.constant 0.000000e+00 : f32
      %19 = vector.broadcast %cst_12 : f32 to vector<2x16xf32>
      %c0_13 = arith.constant 0 : index
      %c0_14 = arith.constant 0 : index
      %20 = vector.load %arg8[%c0_13, %c0_14] : memref<2x16xf32, #tpu.memory_space<vmem>>, vector<2x16xf32>
      tpu.vector_store %arg8[%c0_13, %c0_14], %19 {strides = array<i32>} : memref<2x16xf32, #tpu.memory_space<vmem>>, vector<2x16xf32>,
    } else {
    }
    %c0 = arith.constant 0 : index
    %c0_1 = arith.constant 0 : index
    %3 = vector.load %arg3[%c0, %c0_1] : memref<16x1xi32, #tpu.memory_space<vmem>>, vector<16x1xi32>
    %c0_2 = arith.constant 0 : index
    %c0_3 = arith.constant 0 : index
    %4 = vector.load %arg5[%c0_2, %c0_3] : memref<1x16xi32, #tpu.memory_space<vmem>>, vector<1x16xi32>
    %5 = vector.broadcast %3 : vector<16x1xi32> to vector<16x16xi32>
    %6 = vector.broadcast %4 : vector<1x16xi32> to vector<16x16xi32>
    %7 = arith.cmpi eq, %5, %6 : vector<16x16xi32>
    %8 = arith.extui %7 : vector<16x16xi1> to vector<16x16xi32>
    %9 = arith.sitofp %8 : vector<16x16xi32> to vector<16x16xf32>
    %10 = arith.truncf %9 : vector<16x16xf32> to vector<16x16xbf16>
    %c0_4 = arith.constant 0 : index
    %c0_5 = arith.constant 0 : index
    %11 = vector.load %arg8[%c0_4, %c0_5] : memref<2x16xf32, #tpu.memory_space<vmem>>, vector<2x16xf32>
    %c0_6 = arith.constant 0 : index
    %c0_7 = arith.constant 0 : index
    %12 = vector.load %arg4[%c0_6, %c0_7] : memref<2x16xbf16, #tpu.memory_space<vmem>>, vector<2x16xbf16>
    %cst = arith.constant dense<0.000000e+00> : vector<2x16xf32>
    %13 = tpu.matmul %12, %10, %cst {dimension_numbers = #tpu.dot_dimension_numbers<[1], [0], [0], [1], [0, 0, 1, 1], [], []>} : vector<2x16xbf16>, vector<16x16xbf16>, vector<2x16xf32> -> vector<2x16xf32>
    %14 = arith.addf %11, %13 : vector<2x16xf32>
    %c0_8 = arith.constant 0 : index
    %c0_9 = arith.constant 0 : index
    %15 = vector.load %arg8[%c0_8, %c0_9] : memref<2x16xf32, #tpu.memory_space<vmem>>, vector<2x16xf32>
    tpu.vector_store %arg8[%c0_8, %c0_9], %14 {strides = array<i32>} : memref<2x16xf32, #tpu.memory_space<vmem>>, vector<2x16xf32>,
    %c0_i32_10 = arith.constant 0 : i32
    %16 = arith.cmpi eq, %arg1, %c0_i32_10 : i32
    %17 = arith.extui %16 : i1 to i32
    %c0_i32_11 = arith.constant 0 : i32
    %18 = arith.cmpi ne, %17, %c0_i32_11 : i32
    scf.if %18 {
      %c0_12 = arith.constant 0 : index
      %c0_13 = arith.constant 0 : index
      %19 = vector.load %arg6[%c0_12, %c0_13] : memref<1x16xf32, #tpu.memory_space<vmem>>, vector<1x16xf32>
      %c0_14 = arith.constant 0 : index
      %c0_15 = arith.constant 0 : index
      %20 = vector.load %arg8[%c0_14, %c0_15] : memref<2x16xf32, #tpu.memory_space<vmem>>, vector<1x16xf32>
      %21 = arith.subf %20, %19 : vector<1x16xf32>
      %c1 = arith.constant 1 : index
      %c0_16 = arith.constant 0 : index
      %22 = vector.load %arg8[%c1, %c0_16] : memref<2x16xf32, #tpu.memory_space<vmem>>, vector<1x16xf32>
      %cst_17 = arith.constant 1.000000e+00 : f32
      %23 = vector.broadcast %cst_17 : f32 to vector<1x16xf32>
      %24 = arith.subf %22, %23 : vector<1x16xf32>
      %c0_18 = arith.constant 0 : index
      %c0_19 = arith.constant 0 : index
      %25 = memref.load %arg2[%c0_18, %c0_19] : memref<1x1xf32, #tpu.memory_space<smem>>
      %26 = math.exp %19 : vector<1x16xf32>
      %27 = vector.broadcast %25 : f32 to vector<1x16xf32>
      %28 = arith.subf %27, %26 : vector<1x16xf32>
      %29 = math.log %28 : vector<1x16xf32>
      %30 = arith.divf %21, %24 : vector<1x16xf32>
      %31 = arith.subf %29, %30 : vector<1x16xf32>
      %c0_20 = arith.constant 0 : index
      %c0_21 = arith.constant 0 : index
      %32 = vector.load %arg7[%c0_20, %c0_21] : memref<1x16xf32, #tpu.memory_space<vmem>>, vector<1x16xf32>
      tpu.vector_store %arg7[%c0_20, %c0_21], %31 {strides = array<i32>} : memref<1x16xf32, #tpu.memory_space<vmem>>, vector<1x16xf32>,
    } else {
    }
    return
  }
  func.func @transform_0(%arg0: i32, %arg1: i32) -> (i32, i32) {
    %c0_i32 = arith.constant 0 : i32
    %c0_i32_0 = arith.constant 0 : i32
    %c0_i32_1 = arith.constant 0 : i32
    return %c0_i32, %c0_i32_0 : i32, i32
  }
  func.func @transform_1(%arg0: i32, %arg1: i32) -> (i32, i32) {
    %c0_i32 = arith.constant 0 : i32
    %c0_i32_0 = arith.constant 0 : i32
    return %arg1, %c0_i32 : i32, i32
  }
  func.func @transform_2(%arg0: i32, %arg1: i32) -> (i32, i32) {
    %c0_i32 = arith.constant 0 : i32
    %c0_i32_0 = arith.constant 0 : i32
    return %c0_i32, %arg1 : i32, i32
  }
  func.func @transform_3(%arg0: i32, %arg1: i32) -> (i32, i32) {
    %c0_i32 = arith.constant 0 : i32
    %c0_i32_0 = arith.constant 0 : i32
    return %c0_i32, %arg0 : i32, i32
  }
  func.func @transform_4(%arg0: i32, %arg1: i32) -> (i32, i32) {
    %c0_i32 = arith.constant 0 : i32
    %c0_i32_0 = arith.constant 0 : i32
    return %c0_i32, %arg0 : i32, i32
  }
  func.func @transform_5(%arg0: i32, %arg1: i32) -> (i32, i32) {
    %c0_i32 = arith.constant 0 : i32
    %c0_i32_0 = arith.constant 0 : i32
    return %c0_i32, %arg0 : i32, i32
  }
}

</mosaic_0001>

<llo_original>
// kernel: ce_contrastive_loss.2
$region0: #{ce_contrastive_loss.2}
  #allocation0 [shape = 'u32[]', space=smem, size = 0x4, offset = 0x4, fixed_abs, tag = 'smem constant byte address 0x4 - core index']
  #allocation1 [shape = 'u32[72,128]{1,0:T(1,128)}', space=vmem, size = 0x9000, scoped, tag = 'internal scratch']
  %s0 = inlined_call_operand.hbm [shape: f32[8,128], index: 0, kind: input, shape index: {}]
  %s1 = inlined_call_operand.hbm [shape: f32[8,128], index: 1, kind: input, shape index: {}]
  %s2 = inlined_call_operand.vmem [shape: f32[8,1], index: 2, kind: output, shape index: {0}]
  %s3 = inlined_call_operand.vmem [shape: f32[8,1], index: 3, kind: output, shape index: {1}]
  %4 = xla_tuple %s2, %s3
  %s5 = sld [smem:[#allocation0]]
  $region34: #{ce_contrastive_loss.2} parent=0
    _
  %s7 = ssub.s32 1, %s5
  %s8 = scalar_select 0, %s7, %s5
  $region1: #{ce_contrastive_loss.2} parent=0
    #allocation2 [shape = 'u8[4096]{0}', space=vmem, size = 0x1000, scoped, tag = 'input window, operand 0, single buffered']
    #allocation3 [shape = 's32[1]{0}', space=sflag, size = 0x4, scoped, tag = 'scoped memory for ce_contrastive_loss.2']
    #allocation4 [shape = 'u8[4096]{0}', space=vmem, size = 0x1000, scoped, tag = 'input window, operand 1, single buffered']
    #allocation5 [shape = 's32[1]{0}', space=sflag, size = 0x4, scoped, tag = 'scoped memory for ce_contrastive_loss.2']
    %9 = vsyncpa [#allocation3], 0
    %10 = vsyncpa [#allocation5], 0
    // Predicated region
    $region2: #{ce_contrastive_loss.2} parent=1 // pred_check
      _
    $region3: #{ce_contrastive_loss.2} parent=1 // pred_check_branch
      %12 = sbr.rel (0) target = $region5
    $region4: #{ce_contrastive_loss.2} parent=1 // pred_region
      %14 = vsyncadd [#allocation3], 0
      %s16 = sshll.u32 %s0, 4
      %s17 = int_to_ptr.hbm [resolvable:$true] %s16
      %s18 = sshll.u32 [#allocation2], 4
      %s19 = int_to_ptr.vmem [resolvable:$true] %s18
      %21 = dma.hbm_to_vmem [thread:$0]  %s17, 128, %s19, [#allocation3]
    $region5: #{ce_contrastive_loss.2} parent=1 // pred_fallthru
      _
    // Predicated region
    $region6: #{ce_contrastive_loss.2} parent=1 // pred_check
      _
    $region7: #{ce_contrastive_loss.2} parent=1 // pred_check_branch
      %23 = sbr.rel (0) target = $region9
    $region8: #{ce_contrastive_loss.2} parent=1 // pred_region
      %25 = vsyncadd [#allocation5], 0
      %s27 = sshll.u32 %s1, 4
      %s28 = int_to_ptr.hbm [resolvable:$true] %s27
      %s29 = sshll.u32 [#allocation4], 4
      %s30 = int_to_ptr.vmem [resolvable:$true] %s29
      %32 = dma.hbm_to_vmem [thread:$0]  %s28, 128, %s30, [#allocation5]
    $region9: #{ce_contrastive_loss.2} parent=1 // pred_fallthru
      _
    // Predicated region
    $region10: #{ce_contrastive_loss.2} parent=1 // pred_check
      _
    $region11: #{ce_contrastive_loss.2} parent=1 // pred_check_branch
      %34 = sbr.rel (0) target = $region13
    $region12: #{ce_contrastive_loss.2} parent=1 // pred_region
      %36 = dma.done [#allocation3], 128
    $region13: #{ce_contrastive_loss.2} parent=1 // pred_fallthru
      _
    // Predicated region
    $region14: #{ce_contrastive_loss.2} parent=1 // pred_check
      _
    $region15: #{ce_contrastive_loss.2} parent=1 // pred_check_branch
      %38 = sbr.rel (0) target = $region17
    $region16: #{ce_contrastive_loss.2} parent=1 // pred_region
      %40 = dma.done [#allocation5], 128
    $region17: #{ce_contrastive_loss.2} parent=1 // pred_fallthru
      _
    %v41 = vld [vmem:[#allocation2] sm:$0xff]
    %v42 = vmul.f32 %v41, %v41
    %43 = vadd.xlane.f32.xlu0 %v42
    %v44 = vpop.xlane.xlu0 %43
    %v45 = vmax.f32 %v44, 1e-06
    %v46 = vrcp.pop %v45
    %v47 = vmul.f32 %v45, %v46
    %v48 = vsub.f32 1.0, %v47
    %v49 = vmul.f32 %v46, %v48
    %v50 = vadd.f32 %v46, %v49
    %vm51 = vweird.f32 %v45
    %vm52 = vweird.f32 %v46
    %vm53 = vmor %vm51, %vm52
    %v54 = vsel %vm53, %v46, %v50
    %v55 = vand.u32 2147483647, %v45
    %vm56 = vcmp.eq.f32.partialorder %v55, 8.507059e+37
    %v57 = vand.u32 %v45, 2147483648
    %v58 = vor.u32 1.1754944e-38, %v57
    %v59 = vsel %vm56, %v58, %v54
    %v60 = vmul.f32 %v44, %v59
    %v61 = vmul.f32 %v60, 2.0
    %vm62 = vcmask 7168
    %63 = vst.msk [vmem:[%s2] sm:$0xff] %vm62, %v61
    %v64 = vld [vmem:[#allocation4] sm:$0xff]
    %v65 = vmul.f32 %v64, %v64
    %66 = vadd.xlane.f32.xlu0 %v65
    %v67 = vpop.xlane.xlu0 %66
    %v68 = vmax.f32 %v67, 1e-06
    %v69 = vrcp.pop %v68
    %v70 = vmul.f32 %v68, %v69
    %v71 = vsub.f32 1.0, %v70
    %v72 = vmul.f32 %v69, %v71
    %v73 = vadd.f32 %v69, %v72
    %vm74 = vweird.f32 %v68
    %vm75 = vweird.f32 %v69
    %vm76 = vmor %vm74, %vm75
    %v77 = vsel %vm76, %v69, %v73
    %v78 = vand.u32 2147483647, %v68
    %vm79 = vcmp.eq.f32.partialorder %v78, 8.507059e+37
    %v80 = vand.u32 %v68, 2147483648
    %v81 = vor.u32 1.1754944e-38, %v80
    %v82 = vsel %vm79, %v81, %v77
    %v83 = vmul.f32 %v67, %v82
    %v84 = vmul.f32 %v83, 2.0
    %85 = vst.msk [vmem:[%s3] sm:$0xff] %vm62, %v84
    // Predicated region
    $region18: #{ce_contrastive_loss.2} parent=1 // pred_check
      _
    $region19: #{ce_contrastive_loss.2} parent=1 // pred_check_branch
      %87 = sbr.rel (0) target = $region21
    $region20: #{ce_contrastive_loss.2} parent=1 // pred_region
      _
    $region21: #{ce_contrastive_loss.2} parent=1 // pred_fallthru
      _
    // Predicated region
    $region22: #{ce_contrastive_loss.2} parent=1 // pred_check
      _
    $region23: #{ce_contrastive_loss.2} parent=1 // pred_check_branch
      %89 = sbr.rel (0) target = $region25
    $region24: #{ce_contrastive_loss.2} parent=1 // pred_region
      _
    $region25: #{ce_contrastive_loss.2} parent=1 // pred_fallthru
      _
    // Predicated region
    $region26: #{ce_contrastive_loss.2} parent=1 // pred_check
      _
    $region27: #{ce_contrastive_loss.2} parent=1 // pred_check_branch
      %91 = sbr.rel (0) target = $region29
    $region28: #{ce_contrastive_loss.2} parent=1 // pred_region
      _
    $region29: #{ce_contrastive_loss.2} parent=1 // pred_fallthru
      _
    // Predicated region
    $region30: #{ce_contrastive_loss.2} parent=1 // pred_check
      _
    $region31: #{ce_contrastive_loss.2} parent=1 // pred_check_branch
      %93 = sbr.rel (0) target = $region33
    $region32: #{ce_contrastive_loss.2} parent=1 // pred_region
      _
    $region33: #{ce_contrastive_loss.2} parent=1 // pred_fallthru
      _
    %94 = vsyncpa [#allocation3], 1
    %95 = vsyncpa [#allocation5], 1

// kernel: ce_contrastive_loss.3
$region0: #{ce_contrastive_loss.3}
  #allocation0 [shape = 'u32[]', space=smem, size = 0x4, offset = 0x4, fixed_abs, tag = 'smem constant byte address 0x4 - core index']
  #allocation1 [shape = 'u32[72,128]{1,0:T(1,128)}', space=vmem, size = 0x9000, scoped, tag = 'internal scratch']
  #allocation2 [shape = 'f32[2,16]{1,0:T(2,128)}', space=vmem, size = 0x400, scoped, tag = 'scratch operand']
  #allocation3 [shape = 'f32[1,1]{1,0:T(1,128)S(6)}', space=smem, size = 0x200, scoped, tag = 'scoped memory for ce_contrastive_loss.3']
  %s0 = inlined_call_operand.<no memory space> [shape: f32[1,1], index: 0, kind: input, shape index: {}]
  %s1 = inlined_call_operand.vmem [shape: s32[16,1], index: 1, kind: input, shape index: {}]
  %s2 = inlined_call_operand.vmem [shape: bf16[2,16], index: 2, kind: input, shape index: {}]
  %s3 = inlined_call_operand.vmem [shape: s32[1,16], index: 3, kind: input, shape index: {}]
  %s4 = inlined_call_operand.vmem [shape: f32[1,16], index: 4, kind: input, shape index: {}]
  %s5 = inlined_call_operand.vmem [shape: f32[1,16], index: 5, kind: output, shape index: {}]
  %s6 = sld [smem:[#allocation0]]
  $region38: #{ce_contrastive_loss.3} parent=0
    _
  %s8 = ssub.s32 1, %s6
  %s9 = scalar_select 0, %s8, %s6
  %10 = sst [smem:[#allocation3]] %s0
  // Predicated region
  $region2: #{ce_contrastive_loss.3} parent=0 // pred_check
    _
  $region3: #{ce_contrastive_loss.3} parent=0 // pred_check_branch
    %12 = sbr.rel (0) target = $region5
  $region4: #{ce_contrastive_loss.3} parent=0 // pred_region
    _
  $region5: #{ce_contrastive_loss.3} parent=0 // pred_fallthru
    _
  // Predicated region
  $region6: #{ce_contrastive_loss.3} parent=0 // pred_check
    _
  $region7: #{ce_contrastive_loss.3} parent=0 // pred_check_branch
    %14 = sbr.rel (0) target = $region9
  $region8: #{ce_contrastive_loss.3} parent=0 // pred_region
    _
  $region9: #{ce_contrastive_loss.3} parent=0 // pred_fallthru
    _
  // Predicated region
  $region10: #{ce_contrastive_loss.3} parent=0 // pred_check
    _
  $region11: #{ce_contrastive_loss.3} parent=0 // pred_check_branch
    %16 = sbr.rel (0) target = $region13
  $region12: #{ce_contrastive_loss.3} parent=0 // pred_region
    _
  $region13: #{ce_contrastive_loss.3} parent=0 // pred_fallthru
    _
  // Predicated region
  $region14: #{ce_contrastive_loss.3} parent=0 // pred_check
    _
  $region15: #{ce_contrastive_loss.3} parent=0 // pred_check_branch
    %18 = sbr.rel (0) target = $region17
  $region16: #{ce_contrastive_loss.3} parent=0 // pred_region
    _
  $region17: #{ce_contrastive_loss.3} parent=0 // pred_fallthru
    _
  // Predicated region
  $region18: #{ce_contrastive_loss.3} parent=0 // pred_check
    _
  $region19: #{ce_contrastive_loss.3} parent=0 // pred_check_branch
    %20 = sbr.rel (0) target = $region21
  $region20: #{ce_contrastive_loss.3} parent=0 // pred_region
    _
  $region21: #{ce_contrastive_loss.3} parent=0 // pred_fallthru
    _
  %p22 = scmp.eq.s32.totalorder 0, 0
  // Predicated region
  $region22: #{ce_contrastive_loss.3} parent=0 // pred_check
    %p23 = pneg %p22
  $region23: #{ce_contrastive_loss.3} parent=0 // pred_check_branch
    %25 = sbr.rel (%p23) target = $region25
  $region24: #{ce_contrastive_loss.3} parent=0 // pred_region
    %vm26 = vcmask 123904
    %27 = vst.msk [vmem:[#allocation2] sm:$0x3] %vm26, 0.0
  $region25: #{ce_contrastive_loss.3} parent=0 // pred_fallthru
    _
  %v28 = vld [vmem:[%s1] sm:$0xff]
  %v29 = vld [vmem:[%s1 + $0x8] sm:$0xff]
  %v30 = vld [vmem:[%s3] sm:$0x1]
  %31 = vset.pattern.permute.xlu0 0
  %32 = vperm.xlu0 %31, %v28
  %v33 = vpop.permute.xlu0 %32
  %34 = vset.pattern.permute.xlu0 0
  %35 = vperm.xlu0 %34, %v29
  %v36 = vpop.permute.xlu0 %35
  %v37 = vperm.slane %v30, 0
  %vm38 = vcmp.eq.s32.totalorder %v33, %v37
  %vm39 = vcmp.eq.s32.totalorder %v36, %v37
  %v40 = vsel %vm38, 1, 0
  %v41 = vsel %vm39, 1, 0
  %v42 = vcvt.s32.f32 %v40
  %v43 = vcvt.s32.f32 %v41
  %v44 = vpack.c.bf16 %v43, %v42
  %v45 = vld [vmem:[#allocation2] sm:$0x3]
  %v46 = vld [vmem:[%s2] sm:$0x1]
  %vm47 = vcmask 130048
  %v49 = vsel %vm47, %v46, 0
  %51 = vmatpush.bf16.msra.mxu0 0
  %52 = vmatpush.bf16.msra.mxu0 0
  %53 = vmatpush.bf16.msra.mxu0 0
  %54 = vmatpush.bf16.msra.mxu0 0
  %55 = vmatpush.bf16.msra.mxu0 0
  %56 = vmatpush.bf16.msra.mxu0 0
  %57 = vmatpush.bf16.msra.mxu0 0
  %58 = vmatpush.bf16.msra.mxu0 %v44
  %59 = vmatmul.bf16.gmra.mxu0 %v49
  %v60 = vpop.f32.mrf.mxu0
  %v61 = vadd.f32 0.0, %v60
  %v62 = vpop.f32.mrf.mxu0
  %63 = vdwg.mxu0
  %v64 = vadd.f32 %v45, %v61
  %vm65 = vcmask 123904
  %66 = vst.msk [vmem:[#allocation2] sm:$0x3] %vm65, %v64
  // Predicated region
  $region26: #{ce_contrastive_loss.3} parent=0 // pred_check
    %p67 = pneg %p22
  $region27: #{ce_contrastive_loss.3} parent=0 // pred_check_branch
    %69 = sbr.rel (%p67) target = $region29
  $region28: #{ce_contrastive_loss.3} parent=0 // pred_region
    %v70 = vld [vmem:[%s4] sm:$0x1]
    %v71 = vld [vmem:[#allocation2] sm:$0x1]
    %v72 = vsub.f32 %v71, %v70
    %v73 = vld [vmem:[#allocation2 + $0x1] sm:$0x1]
    %v74 = vsub.f32 %v73, 1.0
    %s75 = sld [smem:[#allocation3]]
    %v76 = vmul.f32 %v70, 1.442695
    %v77 = vpow.pop %v76
    %v78 = vstv %s75
    %v79 = vsub.f32 %v78, %v77
    %v80 = vlog2.pop %v79
    %v81 = vmul.f32 %v80, 0.6931472
    %v82 = vrcp.pop %v74
    %v83 = vmul.f32 %v74, %v82
    %v84 = vsub.f32 1.0, %v83
    %v85 = vmul.f32 %v82, %v84
    %v86 = vadd.f32 %v82, %v85
    %vm87 = vweird.f32 %v74
    %vm88 = vweird.f32 %v82
    %vm89 = vmor %vm87, %vm88
    %v90 = vsel %vm89, %v82, %v86
    %v91 = vand.u32 2147483647, %v74
    %vm92 = vcmp.eq.f32.partialorder %v91, 8.507059e+37
    %v93 = vand.u32 %v74, 2147483648
    %v94 = vor.u32 1.1754944e-38, %v93
    %v95 = vsel %vm92, %v94, %v90
    %v96 = vmul.f32 %v72, %v95
    %v97 = vsub.f32 %v81, %v96
    %vm98 = vcmask 122880
    %99 = vst.msk [vmem:[%s5] sm:$0x1] %vm98, %v97
  $region29: #{ce_contrastive_loss.3} parent=0 // pred_fallthru
    _
  // Predicated region
  $region30: #{ce_contrastive_loss.3} parent=0 // pred_check
    _
  $region31: #{ce_contrastive_loss.3} parent=0 // pred_check_branch
    %101 = sbr.rel (0) target = $region33
  $region32: #{ce_contrastive_loss.3} parent=0 // pred_region
    _
  $region33: #{ce_contrastive_loss.3} parent=0 // pred_fallthru
    _
  // Predicated region
  $region34: #{ce_contrastive_loss.3} parent=0 // pred_check
    _
  $region35: #{ce_contrastive_loss.3} parent=0 // pred_check_branch
    %103 = sbr.rel (0) target = $region37
  $region36: #{ce_contrastive_loss.3} parent=0 // pred_region
    _
  $region37: #{ce_contrastive_loss.3} parent=0 // pred_fallthru
    _

</llo_original>
